<compile_context>
chip_gen: v7x
topology: tpu7x:2x2x1
jax: 0.10.0
libtpu: 0.0.40
codegen_flags: <defaults>
</compile_context>

<pallas_src>
import functools

import jax
import jax.numpy as jnp
from jax.experimental import pallas as pl
from jax.experimental.pallas import tpu as pltpu

_SQRT_2PI = (2.0 * 3.14159) ** 0.5   # truncated pi, matches the torch.jit.script constant


def _gaussian_kernel(t_ref, mean_ref, nhiv_ref, coeff_ref, o_ref):
    # t_ref: (tr, 1) per-edge affine-transformed distance.
    # mean/nhiv/coeff: (1, K) per-Gaussian constants (VMEM-resident).
    d = t_ref[...] - mean_ref[...]              # broadcast -> (tr, K)
    arg = (d * d) * nhiv_ref[...]               # -0.5 * ((t-mean)/std)^2
    o_ref[...] = (jnp.exp(arg) * coeff_ref[...]).astype(o_ref.dtype)


def _round_up(n, m):
    return -(-n // m) * m


@functools.partial(jax.jit, static_argnames=("block_rows", "out_dtype"))
def gaussian_layer(x, edge_type, mul_w, bias_w, means_w, stds_w, *,
                   block_rows=4096, out_dtype=None):
    """x: [B, N, N] float; edge_type: [B, N, N] int; mul_w/bias_w: [E, 1];
    means_w/stds_w: [1, K]  ->  [B, N, N, K] (dtype of means_w unless overridden).

    block_rows: row tile; 4096 fits comfortably in default scoped VMEM.  For
    8192, also set vmem_limit_bytes (~48 MiB) via pltpu.CompilerParams.
    out_dtype: optionally emit e.g. bf16 (compute stays f32, cast at the store)
    to halve output HBM traffic on v5e/v6e when downstream consumes bf16.
    """
    B, N1, N2 = x.shape
    K = means_w.shape[-1]
    out_dtype = means_w.dtype if out_dtype is None else out_dtype
    R = B * N1 * N2

    # Data-dependent embedding gather + per-edge affine stays in the XLA
    # wrapper (tiny tables, XLA fuses it); the kernel gets ONE (R,1) stream.
    # TODO(synk): in-kernel one-hot-matmul gather of the [E,2] table not emitted.
    mul = mul_w.reshape(-1)[edge_type].astype(x.dtype)
    bias = bias_w.reshape(-1)[edge_type].astype(x.dtype)
    t = (mul * x + bias).astype(jnp.float32).reshape(R, 1)

    # Per-Gaussian constants, computed once on [1,K] with exact divides.
    mean2d = means_w.astype(jnp.float32).reshape(1, K)
    std = jnp.abs(stds_w.astype(jnp.float32)).reshape(1, K) + 1e-5
    inv_std = 1.0 / std
    nhiv = -0.5 * inv_std * inv_std          # -(1/2) / std^2
    coeff = inv_std * (1.0 / _SQRT_2PI)      # 1 / (sqrt(2*pi) * std)

    # Row tile: multiple of 8 sublanes, capped by the (rounded-up) row count.
    tr = min(_round_up(block_rows, 8), _round_up(R, 8))

    out = pl.pallas_call(
        _gaussian_kernel,
        out_shape=jax.ShapeDtypeStruct((R, K), out_dtype),
        grid=(pl.cdiv(R, tr),),
        in_specs=[
            pl.BlockSpec((tr, 1), lambda i: (i, 0)),   # fused t = mul*x + bias
            pl.BlockSpec((1, K), lambda i: (0, 0)),    # means  (VMEM-resident)
            pl.BlockSpec((1, K), lambda i: (0, 0)),    # -0.5/std^2
            pl.BlockSpec((1, K), lambda i: (0, 0)),    # 1/(sqrt(2pi)*std)
        ],
        out_specs=pl.BlockSpec((tr, K), lambda i: (i, 0)),
        compiler_params=pltpu.CompilerParams(
            dimension_semantics=("parallel",)),
    )(t, mean2d, nhiv, coeff)

    return out.reshape(B, N1, N2, K)


def reference(x, edge_type, mul_w, bias_w, means_w, stds_w):
    K = means_w.shape[-1]
    mul = mul_w.reshape(-1)[edge_type].astype(x.dtype)[..., None]
    bias = bias_w.reshape(-1)[edge_type].astype(x.dtype)[..., None]
    t = (mul * x[..., None] + bias).astype(jnp.float32)
    t = jnp.broadcast_to(t, (*x.shape, K))
    mean = means_w.astype(jnp.float32).reshape(-1)
    std = jnp.abs(stds_w.astype(jnp.float32).reshape(-1)) + 1e-5
    a = (2.0 * 3.14159) ** 0.5
    out = jnp.exp(-0.5 * ((t - mean) / std) ** 2) / (a * std)
    return out.astype(means_w.dtype)


if __name__ == "__main__":
    # Small shapes consistent with the module: K=128 Gaussian basis functions,
    # 64 edge types, a 2 x 16 x 16 pairwise-distance tensor.
    B, N, K, edge_types = 2, 16, 128, 64

    key = jax.random.PRNGKey(0)
    kx, ke, km, ks, kmu, kb = jax.random.split(key, 6)

    x = jax.random.uniform(kx, (B, N, N), jnp.float32, 0.0, 6.0)
    edge_type = jax.random.randint(ke, (B, N, N), 0, edge_types, jnp.int32)

    # Module init is means/stds ~ U(0, 3), mul = 1, bias = 0; perturb mul/bias
    # slightly so the gather + affine path is actually exercised.
    means_w = jax.random.uniform(km, (1, K), jnp.float32, 0.0, 3.0)
    stds_w = jax.random.uniform(ks, (1, K), jnp.float32, 0.0, 3.0)
    mul_w = 1.0 + 0.1 * jax.random.normal(kmu, (edge_types, 1), jnp.float32)
    bias_w = 0.05 * jax.random.normal(kb, (edge_types, 1), jnp.float32)

    # Case 1: R = 512 divisible by the tile (block_rows=128 -> grid=(4,)).
    out = gaussian_layer(x, edge_type, mul_w, bias_w, means_w, stds_w,
                         block_rows=128)
    out = jax.block_until_ready(out)
    ref = reference(x, edge_type, mul_w, bias_w, means_w, stds_w)
    assert out.shape == (B, N, N, K), out.shape
    err1 = float(jnp.max(jnp.abs(out - ref)))
    assert jnp.allclose(out, ref, atol=1e-5, rtol=1e-4), err1

    # Case 2: ragged last block (R = 2*13*13 = 338, not a multiple of 128),
    # exercising the masked boundary store path (no pad / slice in wrapper).
    x2 = x[:, :13, :13]
    e2 = edge_type[:, :13, :13]
    out2 = gaussian_layer(x2, e2, mul_w, bias_w, means_w, stds_w,
                          block_rows=128)
    out2 = jax.block_until_ready(out2)
    ref2 = reference(x2, e2, mul_w, bias_w, means_w, stds_w)
    assert out2.shape == (B, 13, 13, K), out2.shape
    err2 = float(jnp.max(jnp.abs(out2 - ref2)))
    assert jnp.allclose(out2, ref2, atol=1e-5, rtol=1e-4), err2

    # Case 3: production-default tile (here capped to the full 512 rows).
    out3 = gaussian_layer(x, edge_type, mul_w, bias_w, means_w, stds_w)
    out3 = jax.block_until_ready(out3)
    assert jnp.allclose(out3, ref, atol=1e-5, rtol=1e-4)

    print("KERNEL_OK")
</pallas_src>

<mosaic_0001>
module attributes {stable_mosaic.version = 11 : i64} {
  func.func @_gaussian_kernel(%arg0: i32, %arg1: memref<128x1xf32, #tpu.memory_space<vmem>>, %arg2: memref<1x128xf32, #tpu.memory_space<vmem>>, %arg3: memref<1x128xf32, #tpu.memory_space<vmem>>, %arg4: memref<1x128xf32, #tpu.memory_space<vmem>>, %arg5: memref<128x128xf32, #tpu.memory_space<vmem>>) attributes {dimension_semantics = [#tpu.dimension_semantics<parallel>], iteration_bounds = array<i64: 4>, scalar_prefetch = 0 : i64, scratch_operands = 0 : i64, tpu.core_type = #tpu.core_type<tc>, window_params = [{transform_indices = @transform_0, window_bounds = array<i64: 128, 1>}, {pipeline_mode = #tpu.pipeline_mode<synchronous>, transform_indices = @transform_1, window_bounds = array<i64: 1, 128>}, {pipeline_mode = #tpu.pipeline_mode<synchronous>, transform_indices = @transform_2, window_bounds = array<i64: 1, 128>}, {pipeline_mode = #tpu.pipeline_mode<synchronous>, transform_indices = @transform_3, window_bounds = array<i64: 1, 128>}, {transform_indices = @transform_4, window_bounds = array<i64: 128, 128>}]} {
    %c0 = arith.constant 0 : index
    %c0_0 = arith.constant 0 : index
    %0 = vector.load %arg1[%c0, %c0_0] : memref<128x1xf32, #tpu.memory_space<vmem>>, vector<128x1xf32>
    %c0_1 = arith.constant 0 : index
    %c0_2 = arith.constant 0 : index
    %1 = vector.load %arg2[%c0_1, %c0_2] : memref<1x128xf32, #tpu.memory_space<vmem>>, vector<1x128xf32>
    %2 = vector.broadcast %0 : vector<128x1xf32> to vector<128x128xf32>
    %3 = vector.broadcast %1 : vector<1x128xf32> to vector<128x128xf32>
    %4 = arith.subf %2, %3 : vector<128x128xf32>
    %5 = arith.mulf %4, %4 : vector<128x128xf32>
    %c0_3 = arith.constant 0 : index
    %c0_4 = arith.constant 0 : index
    %6 = vector.load %arg3[%c0_3, %c0_4] : memref<1x128xf32, #tpu.memory_space<vmem>>, vector<1x128xf32>
    %7 = vector.broadcast %6 : vector<1x128xf32> to vector<128x128xf32>
    %8 = arith.mulf %5, %7 : vector<128x128xf32>
    %9 = math.exp %8 : vector<128x128xf32>
    %c0_5 = arith.constant 0 : index
    %c0_6 = arith.constant 0 : index
    %10 = vector.load %arg4[%c0_5, %c0_6] : memref<1x128xf32, #tpu.memory_space<vmem>>, vector<1x128xf32>
    %11 = vector.broadcast %10 : vector<1x128xf32> to vector<128x128xf32>
    %12 = arith.mulf %9, %11 : vector<128x128xf32>
    %c0_7 = arith.constant 0 : index
    %c0_8 = arith.constant 0 : index
    %13 = vector.load %arg5[%c0_7, %c0_8] : memref<128x128xf32, #tpu.memory_space<vmem>>, vector<128x128xf32>
    tpu.vector_store %arg5[%c0_7, %c0_8], %12 {strides = array<i32>} : memref<128x128xf32, #tpu.memory_space<vmem>>, vector<128x128xf32>,
    return
  }
  func.func @transform_0(%arg0: i32) -> (i32, i32) {
    %c0_i32 = arith.constant 0 : i32
    %c0_i32_0 = arith.constant 0 : i32
    return %arg0, %c0_i32 : i32, i32
  }
  func.func @transform_1(%arg0: i32) -> (i32, i32) {
    %c0_i32 = arith.constant 0 : i32
    %c0_i32_0 = arith.constant 0 : i32
    %c0_i32_1 = arith.constant 0 : i32
    return %c0_i32, %c0_i32_0 : i32, i32
  }
  func.func @transform_2(%arg0: i32) -> (i32, i32) {
    %c0_i32 = arith.constant 0 : i32
    %c0_i32_0 = arith.constant 0 : i32
    %c0_i32_1 = arith.constant 0 : i32
    return %c0_i32, %c0_i32_0 : i32, i32
  }
  func.func @transform_3(%arg0: i32) -> (i32, i32) {
    %c0_i32 = arith.constant 0 : i32
    %c0_i32_0 = arith.constant 0 : i32
    %c0_i32_1 = arith.constant 0 : i32
    return %c0_i32, %c0_i32_0 : i32, i32
  }
  func.func @transform_4(%arg0: i32) -> (i32, i32) {
    %c0_i32 = arith.constant 0 : i32
    %c0_i32_0 = arith.constant 0 : i32
    return %arg0, %c0_i32 : i32, i32
  }
}

</mosaic_0001>

<llo_original>
// kernel: gaussian_layer.1
$region0: #{gaussian_layer.1}
  #allocation0 [shape = 'u32[]', space=smem, size = 0x4, offset = 0x4, fixed_abs, tag = 'smem constant byte address 0x4 - core index']
  #allocation1 [shape = 'u32[144,128]{1,0:T(1,128)}', space=vmem, size = 0x12000, scoped, tag = 'internal scratch']
  %s0 = inlined_call_operand.vmem [shape: f32[512,1], index: 0, kind: input, shape index: {}]
  %s1 = inlined_call_operand.vmem [shape: f32[1,128], index: 1, kind: input, shape index: {}]
  %s2 = inlined_call_operand.vmem [shape: f32[1,128], index: 2, kind: input, shape index: {}]
  %s3 = inlined_call_operand.vmem [shape: f32[1,128], index: 3, kind: input, shape index: {}]
  %s4 = inlined_call_operand.hbm [shape: f32[512,128], index: 4, kind: output, shape index: {}]
  %s5 = sld [smem:[#allocation0]]
  $region49: #{gaussian_layer.1} parent=0
    _
  %s7 = ssub.s32 1, %s5
  %s8 = scalar_select 0, %s7, %s5
  $region1: #{gaussian_layer.1} parent=0
    #allocation2 [shape = 'u8[131072]{0}', space=vmem, size = 0x20000, scoped, tag = 'output window, operand 0']
    #allocation3 [shape = 's32[2]{0}', space=sflag, size = 0x8, scoped, tag = 'scoped memory for gaussian_layer.1']
    %9 = vsyncpa [#allocation3], 0
    %s10 = scalar_lea.sflag [#allocation3], 1
    %11 = vsyncpa %s10, 0
    loop: start=0, step=1, limit=6
    $region2: #{gaussian_layer.1} parent=1 // loop_pre_header
      _
    $region3: #{gaussian_layer.1} parent=1 // loop_header
      %s13 = sphi 0, %s17
      %p14 = scmp.ge.s32.totalorder %s13, 6
      %s23 = sphi 0, %s25
      %s26 = sphi 0, %s23
      %s27 = sphi 0, %s26
      %s43 = sphi 0, %s27
      %s47 = sphi 0, %s47
      %s49 = sphi 0, %s47
      %s50 = sphi 0, %s49
      %s64 = sphi 0, %s50
      %s68 = sphi 0, %s68
      %s70 = sphi 0, %s68
      %s71 = sphi 0, %s70
      %s85 = sphi 0, %s71
      %s89 = sphi 0, %s89
      %s91 = sphi 0, %s89
      %s92 = sphi 0, %s91
      %s106 = sphi 0, %s92
      %s112 = sphi 0, %s114
      %s115 = sphi 0, %s112
      %s116 = sphi 0, %s115
      %s132 = sphi 0, %s116
    $region4: #{gaussian_layer.1} parent=1 // loop_header_branch
      %16 = sbr.rel (%p14) target = $region8
    $region5: #{gaussian_layer.1} parent=1 // loop_body
      %s18 = ssub.s32 %s13, 1
      %s19 = ssub.s32 %s13, 2
      %s20 = sadd.s32 %s13, 1
      %s21 = ssub.s32 %s13, %s20
      %p22 = scmp.eq.s32.totalorder %s21, 0
      %s24 = sadd.s32 %s23, 1
      %s25 = scalar_select %p22, %s23, %s24
      %p28 = pneg %p22
      %p29 = scmp.eq.s32.totalorder %s13, 3
      %p30 = por %p28, %p29
      %p31 = scmp.ne.s32.totalorder %s23, %s26
      %p32 = scmp.eq.s32.totalorder %s13, 0
      %p33 = por %p31, %p32
      %p34 = scmp.ne.s32.totalorder %s23, %s26
      %p35 = scmp.eq.s32.totalorder %s18, 3
      %p36 = por %p34, %p35
      %p37 = scmp.ne.s32.totalorder %s26, %s27
      %p38 = scmp.eq.s32.totalorder %s18, 0
      %p39 = por %p37, %p38
      %p40 = scmp.ne.s32.totalorder %s26, %s27
      %p41 = scmp.eq.s32.totalorder %s19, 3
      %p42 = por %p40, %p41
      %p44 = scmp.ne.s32.totalorder %s27, %s43
      %p45 = scmp.eq.s32.totalorder %s19, 0
      %p46 = por %p44, %p45
      %s48 = sadd.s32 %s47, 1
      %p51 = scmp.eq.s32.totalorder %s13, 3
      %p52 = scmp.ne.s32.totalorder %s47, %s49
      %p53 = scmp.eq.s32.totalorder %s13, 0
      %p54 = por %p52, %p53
      %p55 = scmp.ne.s32.totalorder %s47, %s49
      %p56 = scmp.eq.s32.totalorder %s18, 3
      %p57 = por %p55, %p56
      %p58 = scmp.ne.s32.totalorder %s49, %s50
      %p59 = scmp.eq.s32.totalorder %s18, 0
      %p60 = por %p58, %p59
      %p61 = scmp.ne.s32.totalorder %s49, %s50
      %p62 = scmp.eq.s32.totalorder %s19, 3
      %p63 = por %p61, %p62
      %p65 = scmp.ne.s32.totalorder %s50, %s64
      %p66 = scmp.eq.s32.totalorder %s19, 0
      %p67 = por %p65, %p66
      %s69 = sadd.s32 %s68, 1
      %p72 = scmp.eq.s32.totalorder %s13, 3
      %p73 = scmp.ne.s32.totalorder %s68, %s70
      %p74 = scmp.eq.s32.totalorder %s13, 0
      %p75 = por %p73, %p74
      %p76 = scmp.ne.s32.totalorder %s68, %s70
      %p77 = scmp.eq.s32.totalorder %s18, 3
      %p78 = por %p76, %p77
      %p79 = scmp.ne.s32.totalorder %s70, %s71
      %p80 = scmp.eq.s32.totalorder %s18, 0
      %p81 = por %p79, %p80
      %p82 = scmp.ne.s32.totalorder %s70, %s71
      %p83 = scmp.eq.s32.totalorder %s19, 3
      %p84 = por %p82, %p83
      %p86 = scmp.ne.s32.totalorder %s71, %s85
      %p87 = scmp.eq.s32.totalorder %s19, 0
      %p88 = por %p86, %p87
      %s90 = sadd.s32 %s89, 1
      %p93 = scmp.eq.s32.totalorder %s13, 3
      %p94 = scmp.ne.s32.totalorder %s89, %s91
      %p95 = scmp.eq.s32.totalorder %s13, 0
      %p96 = por %p94, %p95
      %p97 = scmp.ne.s32.totalorder %s89, %s91
      %p98 = scmp.eq.s32.totalorder %s18, 3
      %p99 = por %p97, %p98
      %p100 = scmp.ne.s32.totalorder %s91, %s92
      %p101 = scmp.eq.s32.totalorder %s18, 0
      %p102 = por %p100, %p101
      %p103 = scmp.ne.s32.totalorder %s91, %s92
      %p104 = scmp.eq.s32.totalorder %s19, 3
      %p105 = por %p103, %p104
      %p107 = scmp.ne.s32.totalorder %s92, %s106
      %p108 = scmp.eq.s32.totalorder %s19, 0
      %p109 = por %p107, %p108
      %s110 = ssub.s32 %s13, %s20
      %p111 = scmp.eq.s32.totalorder %s110, 0
      %s113 = sadd.s32 %s112, 1
      %s114 = scalar_select %p111, %s112, %s113
      %p117 = pneg %p111
      %p118 = scmp.eq.s32.totalorder %s13, 3
      %p119 = por %p117, %p118
      %p120 = scmp.ne.s32.totalorder %s112, %s115
      %p121 = scmp.eq.s32.totalorder %s13, 0
      %p122 = por %p120, %p121
      %p123 = scmp.ne.s32.totalorder %s112, %s115
      %p124 = scmp.eq.s32.totalorder %s18, 3
      %p125 = por %p123, %p124
      %p126 = scmp.ne.s32.totalorder %s115, %s116
      %p127 = scmp.eq.s32.totalorder %s18, 0
      %p128 = por %p126, %p127
      %p129 = scmp.ne.s32.totalorder %s115, %s116
      %p130 = scmp.eq.s32.totalorder %s19, 3
      %p131 = por %p129, %p130
      %p133 = scmp.ne.s32.totalorder %s116, %s132
      %p134 = scmp.eq.s32.totalorder %s19, 0
      %p135 = por %p133, %p134
      %p136 = scmp.le.s32.totalorder 1, %s13
      %p137 = scmp.lt.s32.totalorder %s13, 5
      %p138 = pnand %p136, %p137
      %p139 = pneg %p138
      // Predicated region
      $region9: #{gaussian_layer.1} parent=5 // pred_check
        _
      $region10: #{gaussian_layer.1} parent=5 // pred_check_branch
        %141 = sbr.rel (%p138) target = $region12
      $region11: #{gaussian_layer.1} parent=5 // pred_region
        %s142 = ssub.s32 %s13, 1
        // Predicated region
        $region13: #{gaussian_layer.1} parent=11 // pred_check
          %p143 = pneg %p60
        $region14: #{gaussian_layer.1} parent=11 // pred_check_branch
          %145 = sbr.rel (%p143) target = $region16
        $region15: #{gaussian_layer.1} parent=11 // pred_region
          _
        $region16: #{gaussian_layer.1} parent=11 // pred_fallthru
          _
        // Predicated region
        $region17: #{gaussian_layer.1} parent=11 // pred_check
          %p146 = pneg %p81
        $region18: #{gaussian_layer.1} parent=11 // pred_check_branch
          %148 = sbr.rel (%p146) target = $region20
        $region19: #{gaussian_layer.1} parent=11 // pred_region
          _
        $region20: #{gaussian_layer.1} parent=11 // pred_fallthru
          _
        // Predicated region
        $region21: #{gaussian_layer.1} parent=11 // pred_check
          %p149 = pneg %p102
        $region22: #{gaussian_layer.1} parent=11 // pred_check_branch
          %151 = sbr.rel (%p149) target = $region24
        $region23: #{gaussian_layer.1} parent=11 // pred_region
          _
        $region24: #{gaussian_layer.1} parent=11 // pred_fallthru
          _
      $region12: #{gaussian_layer.1} parent=5 // pred_fallthru
        _
      %p152 = scmp.lt.s32.totalorder %s13, 4
      // Predicated region
      $region25: #{gaussian_layer.1} parent=5 // pred_check
        %p153 = pneg %p152
      $region26: #{gaussian_layer.1} parent=5 // pred_check_branch
        %155 = sbr.rel (%p153) target = $region28
      $region27: #{gaussian_layer.1} parent=5 // pred_region
        // Predicated region
        $region29: #{gaussian_layer.1} parent=27 // pred_check
          %p156 = pneg %p33
        $region30: #{gaussian_layer.1} parent=27 // pred_check_branch
          %158 = sbr.rel (%p156) target = $region32
        $region31: #{gaussian_layer.1} parent=27 // pred_region
          %s159 = smul.u32 16, %s13
          %p160 = scmp.lt.s32.totalorder %s159, 63
          %s161 = scalar_select %p160, %s159, 63
          %s162 = smul.addr %s161, 8
          %s163 = scalar_lea.vmem %s0, %s162
          %s164 = smul.u32 16, %s13
        $region32: #{gaussian_layer.1} parent=27 // pred_fallthru
          _
      $region28: #{gaussian_layer.1} parent=5 // pred_fallthru
        _
      %p165 = scmp.le.s32.totalorder 1, %s13
      %p166 = scmp.lt.s32.totalorder %s13, 5
      %p167 = pnand %p165, %p166
      %p168 = pneg %p167
      // Predicated region
      $region33: #{gaussian_layer.1} parent=5 // pred_check
        _
      $region34: #{gaussian_layer.1} parent=5 // pred_check_branch
        %170 = sbr.rel (%p167) target = $region36
      $region35: #{gaussian_layer.1} parent=5 // pred_region
        %s171 = ssub.s32 %s13, 1
        %s172 = smul.u32 16, %s18
        %p173 = scmp.lt.s32.totalorder %s172, 63
        %s174 = scalar_select %p173, %s172, 63
        %s175 = smul.addr %s174, 8
        %s176 = scalar_lea.vmem %s0, %s175
        %p177 = pneg %p39
        %p178 = pneg %p36
        %p179 = pneg %p60
        %p180 = pneg %p57
        %p181 = pneg %p81
        %p182 = pneg %p78
        %p183 = pneg %p102
        %p184 = pneg %p99
        %p185 = pneg %p128
        %p186 = pneg %p125
        %s187 = sand.u32 %s115, 1
        %s188 = scalar_lea.sflag [#allocation3], %s187
        %s189 = sand.u32 %s115, 1
        %s190 = smul.addr %s189, 128
        %s191 = scalar_lea.vmem [#allocation2], %s190
        %s192 = smul.u32 16, %s18
        %p193 = scmp.lt.s32.totalorder %s192, 63
        %s194 = scalar_select %p193, %s192, 63
        %s195 = smul.addr %s194, 8
        %s196 = scalar_lea.vmem %s0, %s195
        %s197 = smul.u32 16, %s18
        %s198 = smul.u32 16, %s18
        %v199 = vld [vmem:[%s196] sm:$0xff]
        %v200 = vld [vmem:[%s196 + $0x8] sm:$0xff]
        %v201 = vld [vmem:[%s196 + $0x10] sm:$0xff]
        %v202 = vld [vmem:[%s196 + $0x18] sm:$0xff]
        %v203 = vld [vmem:[%s196 + $0x20] sm:$0xff]
        %v204 = vld [vmem:[%s196 + $0x28] sm:$0xff]
        %v205 = vld [vmem:[%s196 + $0x30] sm:$0xff]
        %v206 = vld [vmem:[%s196 + $0x38] sm:$0xff]
        %v207 = vld [vmem:[%s196 + $0x40] sm:$0xff]
        %v208 = vld [vmem:[%s196 + $0x48] sm:$0xff]
        %v209 = vld [vmem:[%s196 + $0x50] sm:$0xff]
        %v210 = vld [vmem:[%s196 + $0x58] sm:$0xff]
        %v211 = vld [vmem:[%s196 + $0x60] sm:$0xff]
        %v212 = vld [vmem:[%s196 + $0x68] sm:$0xff]
        %v213 = vld [vmem:[%s196 + $0x70] sm:$0xff]
        %v214 = vld [vmem:[%s196 + $0x78] sm:$0xff]
        %v215 = vld [vmem:[%s1] sm:$0x1]
        %217 = vset.pattern.permute.xlu0 0
        %218 = vperm.xlu0 %217, %v199
        %v219 = vpop.permute.xlu0 %218
        %222 = vset.pattern.permute.xlu0 0
        %223 = vperm.xlu0 %222, %v200
        %v224 = vpop.permute.xlu0 %223
        %227 = vset.pattern.permute.xlu0 0
        %228 = vperm.xlu0 %227, %v201
        %v229 = vpop.permute.xlu0 %228
        %232 = vset.pattern.permute.xlu0 0
        %233 = vperm.xlu0 %232, %v202
        %v234 = vpop.permute.xlu0 %233
        %237 = vset.pattern.permute.xlu0 0
        %238 = vperm.xlu0 %237, %v203
        %v239 = vpop.permute.xlu0 %238
        %242 = vset.pattern.permute.xlu0 0
        %243 = vperm.xlu0 %242, %v204
        %v244 = vpop.permute.xlu0 %243
        %247 = vset.pattern.permute.xlu0 0
        %248 = vperm.xlu0 %247, %v205
        %v249 = vpop.permute.xlu0 %248
        %252 = vset.pattern.permute.xlu0 0
        %253 = vperm.xlu0 %252, %v206
        %v254 = vpop.permute.xlu0 %253
        %257 = vset.pattern.permute.xlu0 0
        %258 = vperm.xlu0 %257, %v207
        %v259 = vpop.permute.xlu0 %258
        %262 = vset.pattern.permute.xlu0 0
        %263 = vperm.xlu0 %262, %v208
        %v264 = vpop.permute.xlu0 %263
        %267 = vset.pattern.permute.xlu0 0
        %268 = vperm.xlu0 %267, %v209
        %v269 = vpop.permute.xlu0 %268
        %272 = vset.pattern.permute.xlu0 0
        %273 = vperm.xlu0 %272, %v210
        %v274 = vpop.permute.xlu0 %273
        %277 = vset.pattern.permute.xlu0 0
        %278 = vperm.xlu0 %277, %v211
        %v279 = vpop.permute.xlu0 %278
        %282 = vset.pattern.permute.xlu0 0
        %283 = vperm.xlu0 %282, %v212
        %v284 = vpop.permute.xlu0 %283
        %287 = vset.pattern.permute.xlu0 0
        %288 = vperm.xlu0 %287, %v213
        %v289 = vpop.permute.xlu0 %288
        %292 = vset.pattern.permute.xlu0 0
        %293 = vperm.xlu0 %292, %v214
        %v294 = vpop.permute.xlu0 %293
        %v297 = vlaneseq
        %v298 = vshrl.u32 %v297, 7
        %v299 = vsub.s32 0, %v298
        %v300 = vrot.slane %v215, %v299
        %v302 = vsub.f32 %v219, %v300
        %v303 = vsub.f32 %v224, %v300
        %v304 = vsub.f32 %v229, %v300
        %v305 = vsub.f32 %v234, %v300
        %v306 = vsub.f32 %v239, %v300
        %v307 = vsub.f32 %v244, %v300
        %v308 = vsub.f32 %v249, %v300
        %v309 = vsub.f32 %v254, %v300
        %v310 = vsub.f32 %v259, %v300
        %v311 = vsub.f32 %v264, %v300
        %v312 = vsub.f32 %v269, %v300
        %v313 = vsub.f32 %v274, %v300
        %v314 = vsub.f32 %v279, %v300
        %v315 = vsub.f32 %v284, %v300
        %v316 = vsub.f32 %v289, %v300
        %v317 = vsub.f32 %v294, %v300
        %v318 = vmul.f32 %v302, %v302
        %v319 = vmul.f32 %v303, %v303
        %v320 = vmul.f32 %v304, %v304
        %v321 = vmul.f32 %v305, %v305
        %v322 = vmul.f32 %v306, %v306
        %v323 = vmul.f32 %v307, %v307
        %v324 = vmul.f32 %v308, %v308
        %v325 = vmul.f32 %v309, %v309
        %v326 = vmul.f32 %v310, %v310
        %v327 = vmul.f32 %v311, %v311
        %v328 = vmul.f32 %v312, %v312
        %v329 = vmul.f32 %v313, %v313
        %v330 = vmul.f32 %v314, %v314
        %v331 = vmul.f32 %v315, %v315
        %v332 = vmul.f32 %v316, %v316
        %v333 = vmul.f32 %v317, %v317
        %v334 = vld [vmem:[%s2] sm:$0x1]
        %v336 = vlaneseq
        %v337 = vshrl.u32 %v336, 7
        %v338 = vsub.s32 0, %v337
        %v339 = vrot.slane %v334, %v338
        %v341 = vmul.f32 %v318, %v339
        %v342 = vmul.f32 %v319, %v339
        %v343 = vmul.f32 %v320, %v339
        %v344 = vmul.f32 %v321, %v339
        %v345 = vmul.f32 %v322, %v339
        %v346 = vmul.f32 %v323, %v339
        %v347 = vmul.f32 %v324, %v339
        %v348 = vmul.f32 %v325, %v339
        %v349 = vmul.f32 %v326, %v339
        %v350 = vmul.f32 %v327, %v339
        %v351 = vmul.f32 %v328, %v339
        %v352 = vmul.f32 %v329, %v339
        %v353 = vmul.f32 %v330, %v339
        %v354 = vmul.f32 %v331, %v339
        %v355 = vmul.f32 %v332, %v339
        %v356 = vmul.f32 %v333, %v339
        %v357 = vmul.f32 %v341, 1.442695
        %v358 = vpow.pop %v357
        %v359 = vmul.f32 %v342, 1.442695
        %v360 = vpow.pop %v359
        %v361 = vmul.f32 %v343, 1.442695
        %v362 = vpow.pop %v361
        %v363 = vmul.f32 %v344, 1.442695
        %v364 = vpow.pop %v363
        %v365 = vmul.f32 %v345, 1.442695
        %v366 = vpow.pop %v365
        %v367 = vmul.f32 %v346, 1.442695
        %v368 = vpow.pop %v367
        %v369 = vmul.f32 %v347, 1.442695
        %v370 = vpow.pop %v369
        %v371 = vmul.f32 %v348, 1.442695
        %v372 = vpow.pop %v371
        %v373 = vmul.f32 %v349, 1.442695
        %v374 = vpow.pop %v373
        %v375 = vmul.f32 %v350, 1.442695
        %v376 = vpow.pop %v375
        %v377 = vmul.f32 %v351, 1.442695
        %v378 = vpow.pop %v377
        %v379 = vmul.f32 %v352, 1.442695
        %v380 = vpow.pop %v379
        %v381 = vmul.f32 %v353, 1.442695
        %v382 = vpow.pop %v381
        %v383 = vmul.f32 %v354, 1.442695
        %v384 = vpow.pop %v383
        %v385 = vmul.f32 %v355, 1.442695
        %v386 = vpow.pop %v385
        %v387 = vmul.f32 %v356, 1.442695
        %v388 = vpow.pop %v387
        %v389 = vld [vmem:[%s3] sm:$0x1]
        %v391 = vlaneseq
        %v392 = vshrl.u32 %v391, 7
        %v393 = vsub.s32 0, %v392
        %v394 = vrot.slane %v389, %v393
        %v396 = vmul.f32 %v358, %v394
        %v397 = vmul.f32 %v360, %v394
        %v398 = vmul.f32 %v362, %v394
        %v399 = vmul.f32 %v364, %v394
        %v400 = vmul.f32 %v366, %v394
        %v401 = vmul.f32 %v368, %v394
        %v402 = vmul.f32 %v370, %v394
        %v403 = vmul.f32 %v372, %v394
        %v404 = vmul.f32 %v374, %v394
        %v405 = vmul.f32 %v376, %v394
        %v406 = vmul.f32 %v378, %v394
        %v407 = vmul.f32 %v380, %v394
        %v408 = vmul.f32 %v382, %v394
        %v409 = vmul.f32 %v384, %v394
        %v410 = vmul.f32 %v386, %v394
        %v411 = vmul.f32 %v388, %v394
        %412 = vst [vmem:[%s191] sm:$0xff] %v396
        %413 = vst [vmem:[%s191 + $0x8] sm:$0xff] %v397
        %414 = vst [vmem:[%s191 + $0x10] sm:$0xff] %v398
        %415 = vst [vmem:[%s191 + $0x18] sm:$0xff] %v399
        %416 = vst [vmem:[%s191 + $0x20] sm:$0xff] %v400
        %417 = vst [vmem:[%s191 + $0x28] sm:$0xff] %v401
        %418 = vst [vmem:[%s191 + $0x30] sm:$0xff] %v402
        %419 = vst [vmem:[%s191 + $0x38] sm:$0xff] %v403
        %420 = vst [vmem:[%s191 + $0x40] sm:$0xff] %v404
        %421 = vst [vmem:[%s191 + $0x48] sm:$0xff] %v405
        %422 = vst [vmem:[%s191 + $0x50] sm:$0xff] %v406
        %423 = vst [vmem:[%s191 + $0x58] sm:$0xff] %v407
        %424 = vst [vmem:[%s191 + $0x60] sm:$0xff] %v408
        %425 = vst [vmem:[%s191 + $0x68] sm:$0xff] %v409
        %426 = vst [vmem:[%s191 + $0x70] sm:$0xff] %v410
        %427 = vst [vmem:[%s191 + $0x78] sm:$0xff] %v411
        %s428 = sand.u32 %s115, 1
        %s429 = scalar_lea.sflag [#allocation3], %s428
        %s430 = sand.u32 %s115, 1
        %s431 = smul.addr %s430, 128
        %s432 = scalar_lea.vmem [#allocation2], %s431
        // Predicated region
        $region37: #{gaussian_layer.1} parent=35 // pred_check
          %p433 = pneg %p125
        $region38: #{gaussian_layer.1} parent=35 // pred_check_branch
          %435 = sbr.rel (%p433) target = $region40
        $region39: #{gaussian_layer.1} parent=35 // pred_region
          %s436 = smul.u32 16, %s18
          %s438 = ssub.s32 2048, 2048
          %439 = vsyncadd %s429, %s438
          %s440 = smul.addr %s436, 128
          %s441 = scalar_lea.hbm %s4, %s440
          %s442 = sshll.u32 %s432, 4
          %s443 = int_to_ptr.vmem [resolvable:$true] %s442
          %448 = dma.vmem_to_hbm [thread:$0]  %s443, 2048, %s441, %s429, 128, 128, 8
        $region40: #{gaussian_layer.1} parent=35 // pred_fallthru
          _
      $region36: #{gaussian_layer.1} parent=5 // pred_fallthru
        _
      %p449 = scmp.le.s32.totalorder 2, %s13
      // Predicated region
      $region41: #{gaussian_layer.1} parent=5 // pred_check
        %p450 = pneg %p449
      $region42: #{gaussian_layer.1} parent=5 // pred_check_branch
        %452 = sbr.rel (%p450) target = $region44
      $region43: #{gaussian_layer.1} parent=5 // pred_region
        %s453 = ssub.s32 %s13, 2
        // Predicated region
        $region45: #{gaussian_layer.1} parent=43 // pred_check
          %p454 = pneg %p131
        $region46: #{gaussian_layer.1} parent=43 // pred_check_branch
          %456 = sbr.rel (%p454) target = $region48
        $region47: #{gaussian_layer.1} parent=43 // pred_region
          %s457 = sand.u32 %s116, 1
          %s458 = scalar_lea.sflag [#allocation3], %s457
          %s459 = sand.u32 %s116, 1
          %s460 = smul.addr %s459, 128
          %s461 = scalar_lea.vmem [#allocation2], %s460
          %462 = dma.done %s458, 2048
        $region48: #{gaussian_layer.1} parent=43 // pred_fallthru
          _
      $region44: #{gaussian_layer.1} parent=5 // pred_fallthru
        _
    $region6: #{gaussian_layer.1} parent=1 // loop_footer
      %s17 = sadd.s32 1, %s13
    $region7: #{gaussian_layer.1} parent=1 // loop_footer_branch
      %12 = sbr.rel target = $region3
    $region8: #{gaussian_layer.1} parent=1 // loop_exit
      _
    %463 = vsyncpa [#allocation3], 1
    %s464 = scalar_lea.sflag [#allocation3], 1
    %465 = vsyncpa %s464, 1

</llo_original>
